<compile_context>
chip_gen: v7x
topology: tpu7x:2x2x1
jax: 0.10.0
libtpu: 0.0.40
codegen_flags: <defaults>
</compile_context>

<pallas_src>
import functools

import jax
import jax.numpy as jnp
from jax.experimental import pallas as pl
from jax.experimental.pallas import tpu as pltpu


# ----------------------------------------------------------------------------
# Fused Pallas kernel: masked-linear stack + ReLU + lin1 + ReLU + lin2 + log_softmax
# ----------------------------------------------------------------------------
def fcn_fused_kernel(xt_ref, at_ref, wt_ref, bt_ref, w1_ref, b1_ref, w2_ref, b2_ref,
                     o_ref):
    """Whole FCNModel forward for the full batch in one kernel.

    xt_ref: (bs*F, N)   node-axis-last input (x transposed), F == 1
    at_ref: (N, N)      adjacency^T (dense adj + I, transposed)
    wt_ref: (L, N, N)   per-layer Linear weight, transposed   (torch W^T)
    bt_ref: (L, 1, N)   per-layer Linear bias
    w1_ref: (N, H)      lin1 weight^T
    b1_ref: (1, H)      lin1 bias
    w2_ref: (H, C)      lin2 weight^T
    b2_ref: (1, C)      lin2 bias
    o_ref : (bs, C)     log-probabilities
    """
    h = xt_ref[...]                                   # (bs, N) -- stays resident
    num_layers = wt_ref.shape[0]

    # Masked linear layers over the node axis.  (W * A)^T == W^T * A^T, so the
    # mask is applied elementwise on the already-transposed weight (VPU) and the
    # contraction is a plain lane-dense matmul (MXU).
    for l in range(num_layers):                       # static, unrolled
        wm_t = wt_ref[l] * at_ref[...]                # (N, N) masked weight^T
        h = jnp.dot(h, wm_t, preferred_element_type=jnp.float32) + bt_ref[l]
        h = jnp.maximum(h, 0.0)                       # ReLU

    # mode='cat': torch.stack(xs, -1).view(bs, N, -1).view(bs, N) -- with
    # n_features * num_layers == 1 this is exactly `h` (shape (bs, N)).
    z = jnp.dot(h, w1_ref[...], preferred_element_type=jnp.float32) + b1_ref[...]
    z = jnp.maximum(z, 0.0)                           # relu(lin1(x))
    # dropout(p=0.5) in eval mode == identity
    logits = jnp.dot(z, w2_ref[...], preferred_element_type=jnp.float32) + b2_ref[...]

    # log_softmax (numerically stable)
    mx = jnp.max(logits, axis=-1, keepdims=True)
    s = logits - mx
    lse = jnp.log(jnp.sum(jnp.exp(s), axis=-1, keepdims=True))
    o_ref[...] = s - lse


def fcn_forward(x, batch, params):
    """Single fused pallas_call for the whole forward pass."""
    del batch                                          # unused by the torch forward too
    bs, n, f = x.shape
    num_layers = params["mlp_w"].shape[0]
    # torch's `.view(bs, num_nodes)` in mode='cat' requires this:
    assert f * num_layers == 1, "mode='cat' needs n_features * num_layers == 1"

    # Layout prep only (transposes of parameters / input); all math is in-kernel.
    xt = jnp.transpose(x, (0, 2, 1)).reshape(bs * f, n)        # (bs, N)
    at = params["adj"].T                                       # (N, N)
    wt = jnp.transpose(params["mlp_w"], (0, 2, 1))             # (L, N, N)
    bt = params["mlp_b"][:, None, :]                           # (L, 1, N)
    w1t = params["w1"].T                                       # (N, H)
    b1 = params["b1"][None, :]                                 # (1, H)
    w2t = params["w2"].T                                       # (H, C)
    b2 = params["b2"][None, :]                                 # (1, C)
    hf, c = w1t.shape[1], w2t.shape[1]

    return pl.pallas_call(
        fcn_fused_kernel,
        out_shape=jax.ShapeDtypeStruct((bs, c), jnp.float32),
        grid=(1,),
        in_specs=[
            pl.BlockSpec((bs * f, n), lambda i: (0, 0)),
            pl.BlockSpec((n, n), lambda i: (0, 0)),
            pl.BlockSpec((num_layers, n, n), lambda i: (0, 0, 0)),
            pl.BlockSpec((num_layers, 1, n), lambda i: (0, 0, 0)),
            pl.BlockSpec((n, hf), lambda i: (0, 0)),
            pl.BlockSpec((1, hf), lambda i: (0, 0)),
            pl.BlockSpec((hf, c), lambda i: (0, 0)),
            pl.BlockSpec((1, c), lambda i: (0, 0)),
        ],
        out_specs=pl.BlockSpec((bs, c), lambda i: (0, 0)),
        compiler_params=pltpu.CompilerParams(dimension_semantics=("arbitrary",)),
    )(xt, at, wt, bt, w1t, b1, w2t, b2)


# ----------------------------------------------------------------------------
# Parameter construction (dense adjacency from edge_index, torch-layout weights)
# ----------------------------------------------------------------------------
def build_adjacency(edge_index, n_genes):
    """to_dense_adj(edge_index).view(N, N) + eye(N)."""
    src, dst = edge_index[0], edge_index[1]
    a = jnp.zeros((n_genes, n_genes), jnp.float32).at[src, dst].add(1.0)
    return a + jnp.eye(n_genes, dtype=jnp.float32)


def init_params(key, n_genes, n_classes, num_layers, hidden_fc, edge_index):
    ks = jax.random.split(key, 2 * num_layers + 4)
    it = iter(ks)
    mlp_w = jnp.stack([jax.random.normal(next(it), (n_genes, n_genes), jnp.float32) * 0.1
                       for _ in range(num_layers)])            # (L, N, N) torch layout (out,in)
    mlp_b = jnp.stack([jax.random.normal(next(it), (n_genes,), jnp.float32) * 0.05
                       for _ in range(num_layers)])            # (L, N)
    w1 = jax.random.normal(next(it), (hidden_fc, n_genes), jnp.float32) * 0.1   # lin1 (out,in)
    b1 = jax.random.normal(next(it), (hidden_fc,), jnp.float32) * 0.05
    w2 = jax.random.normal(next(it), (n_classes, hidden_fc), jnp.float32) * 0.1  # lin2 (out,in)
    b2 = jax.random.normal(next(it), (n_classes,), jnp.float32) * 0.05
    adj = build_adjacency(edge_index, n_genes)
    return dict(mlp_w=mlp_w, mlp_b=mlp_b, w1=w1, b1=b1, w2=w2, b2=b2, adj=adj)


# ----------------------------------------------------------------------------
# Pure-JAX reference (mimics the torch forward op-for-op) for correctness check
# ----------------------------------------------------------------------------
def reference_forward(x, params):
    bs, n, f = x.shape
    num_layers = params["mlp_w"].shape[0]
    a = params["adj"]
    h = x
    xs = []
    for l in range(num_layers):
        wm = params["mlp_w"][l] * a                            # masked Linear weight
        ht = jnp.transpose(h, (0, 2, 1))                       # (bs, F, N)
        ht = ht @ wm.T + params["mlp_b"][l]                    # Linear over node axis
        h = jax.nn.relu(jnp.transpose(ht, (0, 2, 1)))          # (bs, N, F)
        xs.append(h)
    xcat = jnp.stack(xs, -1).reshape(bs, n, -1)                # (bs, N, F*L)
    s = xcat.reshape(bs, n)                                    # torch .view(bs, num_nodes)
    z = jax.nn.relu(s @ params["w1"].T + params["b1"])
    logits = z @ params["w2"].T + params["b2"]
    return jax.nn.log_softmax(logits, axis=-1)


# ----------------------------------------------------------------------------
if __name__ == "__main__":
    # Small shapes consistent with the module; n_genes / hidden_fc chosen lane-dense.
    bs = 2
    n_genes = 128          # num_nodes == n_genes (lane-width aligned)
    n_features = 1         # mode='cat' + final .view(bs, N) forces n_features*num_layers == 1
    num_layers = 1
    hidden_fc = 128
    n_classes = 4

    key = jax.random.PRNGKey(0)
    k_x, k_params = jax.random.split(key, 2)

    # Deterministic bidirectional ring graph over the genes.
    idx = jnp.arange(n_genes, dtype=jnp.int32)
    src = jnp.concatenate([idx, (idx + 1) % n_genes])
    dst = jnp.concatenate([(idx + 1) % n_genes, idx])
    edge_index = jnp.stack([src, dst], axis=0)                 # [2, E]

    x = jax.random.normal(k_x, (bs, n_genes, n_features), jnp.float32)
    batch = jnp.zeros((bs,), jnp.int32)                        # unused, kept for signature parity

    params = init_params(k_params, n_genes, n_classes, num_layers, hidden_fc, edge_index)

    fwd = jax.jit(functools.partial(fcn_forward, params=params))
    out = fwd(x, batch)
    jax.block_until_ready(out)

    ref = reference_forward(x, params)
    assert out.shape == (bs, n_classes)
    assert jnp.allclose(out, ref, atol=1e-4, rtol=1e-4), "Pallas output != JAX reference"
    assert jnp.allclose(jnp.exp(out).sum(-1), 1.0, atol=1e-4), "log_softmax not normalized"

    print("KERNEL_OK")
</pallas_src>

<mosaic_0001>
module attributes {stable_mosaic.version = 11 : i64} {
  func.func @fcn_fused_kernel(%arg0: i32, %arg1: memref<2x128xf32, #tpu.memory_space<vmem>>, %arg2: memref<128x128xf32, #tpu.memory_space<vmem>>, %arg3: memref<1x128x128xf32, #tpu.memory_space<vmem>>, %arg4: memref<1x1x128xf32, #tpu.memory_space<vmem>>, %arg5: memref<128x128xf32, #tpu.memory_space<vmem>>, %arg6: memref<1x128xf32, #tpu.memory_space<vmem>>, %arg7: memref<128x4xf32, #tpu.memory_space<vmem>>, %arg8: memref<1x4xf32, #tpu.memory_space<vmem>>, %arg9: memref<2x4xf32, #tpu.memory_space<vmem>>) attributes {dimension_semantics = [#tpu.dimension_semantics<arbitrary>], iteration_bounds = array<i64: 1>, scalar_prefetch = 0 : i64, scratch_operands = 0 : i64, tpu.core_type = #tpu.core_type<tc>, window_params = [{pipeline_mode = #tpu.pipeline_mode<synchronous>, transform_indices = @transform_0, window_bounds = array<i64: 2, 128>}, {pipeline_mode = #tpu.pipeline_mode<synchronous>, transform_indices = @transform_1, window_bounds = array<i64: 128, 128>}, {pipeline_mode = #tpu.pipeline_mode<synchronous>, transform_indices = @transform_2, window_bounds = array<i64: 1, 128, 128>}, {pipeline_mode = #tpu.pipeline_mode<synchronous>, transform_indices = @transform_3, window_bounds = array<i64: 1, 1, 128>}, {pipeline_mode = #tpu.pipeline_mode<synchronous>, transform_indices = @transform_4, window_bounds = array<i64: 128, 128>}, {pipeline_mode = #tpu.pipeline_mode<synchronous>, transform_indices = @transform_5, window_bounds = array<i64: 1, 128>}, {pipeline_mode = #tpu.pipeline_mode<synchronous>, transform_indices = @transform_6, window_bounds = array<i64: 128, 4>}, {pipeline_mode = #tpu.pipeline_mode<synchronous>, transform_indices = @transform_7, window_bounds = array<i64: 1, 4>}, {pipeline_mode = #tpu.pipeline_mode<synchronous>, transform_indices = @transform_8, window_bounds = array<i64: 2, 4>}]} {
    %c0 = arith.constant 0 : index
    %c0_0 = arith.constant 0 : index
    %0 = vector.load %arg1[%c0, %c0_0] : memref<2x128xf32, #tpu.memory_space<vmem>>, vector<2x128xf32>
    %c0_1 = arith.constant 0 : index
    %c0_2 = arith.constant 0 : index
    %c0_3 = arith.constant 0 : index
    %1 = vector.load %arg3[%c0_1, %c0_2, %c0_3] : memref<1x128x128xf32, #tpu.memory_space<vmem>>, vector<1x128x128xf32>
    %2 = vector.shape_cast %1 : vector<1x128x128xf32> to vector<128x128xf32>
    %c0_4 = arith.constant 0 : index
    %c0_5 = arith.constant 0 : index
    %3 = vector.load %arg2[%c0_4, %c0_5] : memref<128x128xf32, #tpu.memory_space<vmem>>, vector<128x128xf32>
    %4 = arith.mulf %2, %3 : vector<128x128xf32>
    %cst = arith.constant dense<0.000000e+00> : vector<2x128xf32>
    %5 = tpu.matmul %0, %4, %cst {dimension_numbers = #tpu.dot_dimension_numbers<[1], [0], [0], [1], [0, 0, 1, 1], [], []>} : vector<2x128xf32>, vector<128x128xf32>, vector<2x128xf32> -> vector<2x128xf32>
    %c0_6 = arith.constant 0 : index
    %c0_7 = arith.constant 0 : index
    %c0_8 = arith.constant 0 : index
    %6 = vector.load %arg4[%c0_6, %c0_7, %c0_8] : memref<1x1x128xf32, #tpu.memory_space<vmem>>, vector<1x1x128xf32>
    %7 = vector.shape_cast %6 : vector<1x1x128xf32> to vector<1x128xf32>
    %8 = vector.broadcast %7 : vector<1x128xf32> to vector<2x128xf32>
    %9 = arith.addf %5, %8 : vector<2x128xf32>
    %cst_9 = arith.constant 0.000000e+00 : f32
    %10 = vector.broadcast %cst_9 : f32 to vector<2x128xf32>
    %11 = arith.maximumf %9, %10 : vector<2x128xf32>
    %c0_10 = arith.constant 0 : index
    %c0_11 = arith.constant 0 : index
    %12 = vector.load %arg5[%c0_10, %c0_11] : memref<128x128xf32, #tpu.memory_space<vmem>>, vector<128x128xf32>
    %cst_12 = arith.constant dense<0.000000e+00> : vector<2x128xf32>
    %13 = tpu.matmul %11, %12, %cst_12 {dimension_numbers = #tpu.dot_dimension_numbers<[1], [0], [0], [1], [0, 0, 1, 1], [], []>} : vector<2x128xf32>, vector<128x128xf32>, vector<2x128xf32> -> vector<2x128xf32>
    %c0_13 = arith.constant 0 : index
    %c0_14 = arith.constant 0 : index
    %14 = vector.load %arg6[%c0_13, %c0_14] : memref<1x128xf32, #tpu.memory_space<vmem>>, vector<1x128xf32>
    %15 = vector.broadcast %14 : vector<1x128xf32> to vector<2x128xf32>
    %16 = arith.addf %13, %15 : vector<2x128xf32>
    %cst_15 = arith.constant 0.000000e+00 : f32
    %17 = vector.broadcast %cst_15 : f32 to vector<2x128xf32>
    %18 = arith.maximumf %16, %17 : vector<2x128xf32>
    %c0_16 = arith.constant 0 : index
    %c0_17 = arith.constant 0 : index
    %19 = vector.load %arg7[%c0_16, %c0_17] : memref<128x4xf32, #tpu.memory_space<vmem>>, vector<128x4xf32>
    %cst_18 = arith.constant dense<0.000000e+00> : vector<2x4xf32>
    %20 = tpu.matmul %18, %19, %cst_18 {dimension_numbers = #tpu.dot_dimension_numbers<[1], [0], [0], [1], [0, 0, 1, 1], [], []>} : vector<2x128xf32>, vector<128x4xf32>, vector<2x4xf32> -> vector<2x4xf32>
    %c0_19 = arith.constant 0 : index
    %c0_20 = arith.constant 0 : index
    %21 = vector.load %arg8[%c0_19, %c0_20] : memref<1x4xf32, #tpu.memory_space<vmem>>, vector<1x4xf32>
    %22 = vector.broadcast %21 : vector<1x4xf32> to vector<2x4xf32>
    %23 = arith.addf %20, %22 : vector<2x4xf32>
    %cst_21 = arith.constant dense<0xFF800000> : vector<2xf32>
    %24 = vector.multi_reduction <maximumf>, %23, %cst_21 [1] : vector<2x4xf32> to vector<2xf32>
    %25 = vector.shape_cast %24 : vector<2xf32> to vector<2x1xf32>
    %26 = vector.broadcast %25 : vector<2x1xf32> to vector<2x4xf32>
    %27 = arith.subf %23, %26 : vector<2x4xf32>
    %28 = math.exp %27 : vector<2x4xf32>
    %cst_22 = arith.constant dense<0.000000e+00> : vector<2xf32>
    %29 = vector.multi_reduction <add>, %28, %cst_22 [1] : vector<2x4xf32> to vector<2xf32>
    %30 = vector.shape_cast %29 : vector<2xf32> to vector<2x1xf32>
    %31 = math.log %30 : vector<2x1xf32>
    %32 = vector.broadcast %31 : vector<2x1xf32> to vector<2x4xf32>
    %33 = arith.subf %27, %32 : vector<2x4xf32>
    %c0_23 = arith.constant 0 : index
    %c0_24 = arith.constant 0 : index
    %34 = vector.load %arg9[%c0_23, %c0_24] : memref<2x4xf32, #tpu.memory_space<vmem>>, vector<2x4xf32>
    tpu.vector_store %arg9[%c0_23, %c0_24], %33 {strides = array<i32>} : memref<2x4xf32, #tpu.memory_space<vmem>>, vector<2x4xf32>,
    return
  }
  func.func @transform_0(%arg0: i32) -> (i32, i32) {
    %c0_i32 = arith.constant 0 : i32
    %c0_i32_0 = arith.constant 0 : i32
    %c0_i32_1 = arith.constant 0 : i32
    return %c0_i32, %c0_i32_0 : i32, i32
  }
  func.func @transform_1(%arg0: i32) -> (i32, i32) {
    %c0_i32 = arith.constant 0 : i32
    %c0_i32_0 = arith.constant 0 : i32
    %c0_i32_1 = arith.constant 0 : i32
    return %c0_i32, %c0_i32_0 : i32, i32
  }
  func.func @transform_2(%arg0: i32) -> (i32, i32, i32) {
    %c0_i32 = arith.constant 0 : i32
    %c0_i32_0 = arith.constant 0 : i32
    %c0_i32_1 = arith.constant 0 : i32
    %c0_i32_2 = arith.constant 0 : i32
    return %c0_i32, %c0_i32_0, %c0_i32_1 : i32, i32, i32
  }
  func.func @transform_3(%arg0: i32) -> (i32, i32, i32) {
    %c0_i32 = arith.constant 0 : i32
    %c0_i32_0 = arith.constant 0 : i32
    %c0_i32_1 = arith.constant 0 : i32
    %c0_i32_2 = arith.constant 0 : i32
    return %c0_i32, %c0_i32_0, %c0_i32_1 : i32, i32, i32
  }
  func.func @transform_4(%arg0: i32) -> (i32, i32) {
    %c0_i32 = arith.constant 0 : i32
    %c0_i32_0 = arith.constant 0 : i32
    %c0_i32_1 = arith.constant 0 : i32
    return %c0_i32, %c0_i32_0 : i32, i32
  }
  func.func @transform_5(%arg0: i32) -> (i32, i32) {
    %c0_i32 = arith.constant 0 : i32
    %c0_i32_0 = arith.constant 0 : i32
    %c0_i32_1 = arith.constant 0 : i32
    return %c0_i32, %c0_i32_0 : i32, i32
  }
  func.func @transform_6(%arg0: i32) -> (i32, i32) {
    %c0_i32 = arith.constant 0 : i32
    %c0_i32_0 = arith.constant 0 : i32
    %c0_i32_1 = arith.constant 0 : i32
    return %c0_i32, %c0_i32_0 : i32, i32
  }
  func.func @transform_7(%arg0: i32) -> (i32, i32) {
    %c0_i32 = arith.constant 0 : i32
    %c0_i32_0 = arith.constant 0 : i32
    %c0_i32_1 = arith.constant 0 : i32
    return %c0_i32, %c0_i32_0 : i32, i32
  }
  func.func @transform_8(%arg0: i32) -> (i32, i32) {
    %c0_i32 = arith.constant 0 : i32
    %c0_i32_0 = arith.constant 0 : i32
    %c0_i32_1 = arith.constant 0 : i32
    return %c0_i32, %c0_i32_0 : i32, i32
  }
}

</mosaic_0001>

<llo_original>
// kernel: fcn_forward.1
$region0: #{fcn_forward.1}
  #allocation0 [shape = 'u32[]', space=smem, size = 0x4, offset = 0x4, fixed_abs, tag = 'smem constant byte address 0x4 - core index']
  #allocation1 [shape = 'u32[144,128]{1,0:T(1,128)}', space=vmem, size = 0x12000, scoped, tag = 'internal scratch']
  %s0 = inlined_call_operand.vmem [shape: f32[2,128], index: 0, kind: input, shape index: {}]
  %s1 = inlined_call_operand.hbm [shape: f32[128,128], index: 1, kind: input, shape index: {}]
  %s2 = inlined_call_operand.hbm [shape: f32[1,128,128], index: 2, kind: input, shape index: {}]
  %s3 = inlined_call_operand.vmem [shape: f32[1,1,128], index: 3, kind: input, shape index: {}]
  %s4 = inlined_call_operand.hbm [shape: f32[128,128], index: 4, kind: input, shape index: {}]
  %s5 = inlined_call_operand.vmem [shape: f32[1,128], index: 5, kind: input, shape index: {}]
  %s6 = inlined_call_operand.hbm [shape: f32[128,4], index: 6, kind: input, shape index: {}]
  %s7 = inlined_call_operand.vmem [shape: f32[1,4], index: 7, kind: input, shape index: {}]
  %s8 = inlined_call_operand.hbm [shape: f32[2,4], index: 8, kind: output, shape index: {}]
  %s9 = sld [smem:[#allocation0]]
  $region58: #{fcn_forward.1} parent=0
    _
  %s11 = ssub.s32 1, %s9
  %s12 = scalar_select 0, %s11, %s9
  $region1: #{fcn_forward.1} parent=0
    #allocation2 [shape = 'u8[65536]{0}', space=vmem, size = 0x10000, scoped, tag = 'input window, operand 1, single buffered']
    #allocation3 [shape = 's32[1]{0}', space=sflag, size = 0x4, scoped, tag = 'scoped memory for fcn_forward.1']
    #allocation4 [shape = 's32[1]{0}', space=sflag, size = 0x4, scoped, tag = 'scoped memory for fcn_forward.1']
    #allocation5 [shape = 'u8[65536]{0}', space=vmem, size = 0x10000, scoped, tag = 'input window, operand 2, single buffered']
    #allocation6 [shape = 's32[1]{0}', space=sflag, size = 0x4, scoped, tag = 'scoped memory for fcn_forward.1']
    #allocation7 [shape = 'u8[65536]{0}', space=vmem, size = 0x10000, scoped, tag = 'input window, operand 4, single buffered']
    #allocation8 [shape = 'u8[65536]{0}', space=vmem, size = 0x10000, scoped, tag = 'input window, operand 6, single buffered']
    #allocation9 [shape = 's32[1]{0}', space=sflag, size = 0x4, scoped, tag = 'scoped memory for fcn_forward.1']
    #allocation10 [shape = 'u8[1024]{0}', space=vmem, size = 0x400, scoped, tag = 'output window, operand 0, single buffered']
    %13 = vsyncpa [#allocation3], 0
    %14 = vsyncpa [#allocation6], 0
    %15 = vsyncpa [#allocation9], 0
    %16 = vsyncpa [#allocation4], 0
    // Predicated region
    $region2: #{fcn_forward.1} parent=1 // pred_check
      _
    $region3: #{fcn_forward.1} parent=1 // pred_check_branch
      %18 = sbr.rel (0) target = $region5
    $region4: #{fcn_forward.1} parent=1 // pred_region
      _
    $region5: #{fcn_forward.1} parent=1 // pred_fallthru
      _
    // Predicated region
    $region6: #{fcn_forward.1} parent=1 // pred_check
      _
    $region7: #{fcn_forward.1} parent=1 // pred_check_branch
      %20 = sbr.rel (0) target = $region9
    $region8: #{fcn_forward.1} parent=1 // pred_region
      %s22 = ssub.s32 2048, 2048
      %23 = vsyncadd [#allocation3], %s22
      %s24 = sshll.u32 [#allocation2], 4
      %s25 = int_to_ptr.vmem [resolvable:$true] %s24
      %30 = dma.hbm_to_vmem [thread:$0]  %s1, 2048, %s25, [#allocation3], 128, 128, 8
    $region9: #{fcn_forward.1} parent=1 // pred_fallthru
      _
    // Predicated region
    $region10: #{fcn_forward.1} parent=1 // pred_check
      _
    $region11: #{fcn_forward.1} parent=1 // pred_check_branch
      %32 = sbr.rel (0) target = $region13
    $region12: #{fcn_forward.1} parent=1 // pred_region
      %s34 = ssub.s32 2048, 2048
      %35 = vsyncadd [#allocation6], %s34
      %s36 = sshll.u32 [#allocation5], 4
      %s37 = int_to_ptr.vmem [resolvable:$true] %s36
      %42 = dma.hbm_to_vmem [thread:$0]  %s2, 2048, %s37, [#allocation6], 128, 128, 8
    $region13: #{fcn_forward.1} parent=1 // pred_fallthru
      _
    // Predicated region
    $region14: #{fcn_forward.1} parent=1 // pred_check
      _
    $region15: #{fcn_forward.1} parent=1 // pred_check_branch
      %44 = sbr.rel (0) target = $region17
    $region16: #{fcn_forward.1} parent=1 // pred_region
      _
    $region17: #{fcn_forward.1} parent=1 // pred_fallthru
      _
    // Predicated region
    $region18: #{fcn_forward.1} parent=1 // pred_check
      _
    $region19: #{fcn_forward.1} parent=1 // pred_check_branch
      %46 = sbr.rel (0) target = $region21
    $region20: #{fcn_forward.1} parent=1 // pred_region
      %s48 = ssub.s32 2048, 2048
      %49 = vsyncadd [#allocation6], %s48
      %s50 = sshll.u32 [#allocation7], 4
      %s51 = int_to_ptr.vmem [resolvable:$true] %s50
      %56 = dma.hbm_to_vmem [thread:$0]  %s4, 2048, %s51, [#allocation6], 128, 128, 8
    $region21: #{fcn_forward.1} parent=1 // pred_fallthru
      _
    // Predicated region
    $region22: #{fcn_forward.1} parent=1 // pred_check
      _
    $region23: #{fcn_forward.1} parent=1 // pred_check_branch
      %58 = sbr.rel (0) target = $region25
    $region24: #{fcn_forward.1} parent=1 // pred_region
      _
    $region25: #{fcn_forward.1} parent=1 // pred_fallthru
      _
    // Predicated region
    $region26: #{fcn_forward.1} parent=1 // pred_check
      _
    $region27: #{fcn_forward.1} parent=1 // pred_check_branch
      %60 = sbr.rel (0) target = $region29
    $region28: #{fcn_forward.1} parent=1 // pred_region
      %s62 = ssub.s32 2048, 2048
      %63 = vsyncadd [#allocation9], %s62
      %s64 = sshll.u32 [#allocation8], 4
      %s65 = int_to_ptr.vmem [resolvable:$true] %s64
      %70 = dma.hbm_to_vmem [thread:$0]  %s6, 2048, %s65, [#allocation9], 128, 128, 8
    $region29: #{fcn_forward.1} parent=1 // pred_fallthru
      _
    // Predicated region
    $region30: #{fcn_forward.1} parent=1 // pred_check
      _
    $region31: #{fcn_forward.1} parent=1 // pred_check_branch
      %72 = sbr.rel (0) target = $region33
    $region32: #{fcn_forward.1} parent=1 // pred_region
      _
    $region33: #{fcn_forward.1} parent=1 // pred_fallthru
      _
    // Predicated region
    $region34: #{fcn_forward.1} parent=1 // pred_check
      _
    $region35: #{fcn_forward.1} parent=1 // pred_check_branch
      %74 = sbr.rel (0) target = $region37
    $region36: #{fcn_forward.1} parent=1 // pred_region
      %75 = dma.done [#allocation3], 2048
    $region37: #{fcn_forward.1} parent=1 // pred_fallthru
      _
    // Predicated region
    $region38: #{fcn_forward.1} parent=1 // pred_check
      _
    $region39: #{fcn_forward.1} parent=1 // pred_check_branch
      %77 = sbr.rel (0) target = $region41
    $region40: #{fcn_forward.1} parent=1 // pred_region
      %78 = dma.done [#allocation6], 2048
    $region41: #{fcn_forward.1} parent=1 // pred_fallthru
      _
    // Predicated region
    $region42: #{fcn_forward.1} parent=1 // pred_check
      _
    $region43: #{fcn_forward.1} parent=1 // pred_check_branch
      %80 = sbr.rel (0) target = $region45
    $region44: #{fcn_forward.1} parent=1 // pred_region
      %81 = dma.done [#allocation6], 2048
    $region45: #{fcn_forward.1} parent=1 // pred_fallthru
      _
    // Predicated region
    $region46: #{fcn_forward.1} parent=1 // pred_check
      _
    $region47: #{fcn_forward.1} parent=1 // pred_check_branch
      %83 = sbr.rel (0) target = $region49
    $region48: #{fcn_forward.1} parent=1 // pred_region
      %84 = dma.done [#allocation9], 2048
    $region49: #{fcn_forward.1} parent=1 // pred_fallthru
      _
    %v85 = vld [vmem:[%s0] sm:$0x3]
    %v86 = vld [vmem:[#allocation5] sm:$0xff]
    %v87 = vld [vmem:[#allocation5 + $0x8] sm:$0xff]
    %v88 = vld [vmem:[#allocation5 + $0x10] sm:$0xff]
    %v89 = vld [vmem:[#allocation5 + $0x18] sm:$0xff]
    %v90 = vld [vmem:[#allocation5 + $0x20] sm:$0xff]
    %v91 = vld [vmem:[#allocation5 + $0x28] sm:$0xff]
    %v92 = vld [vmem:[#allocation5 + $0x30] sm:$0xff]
    %v93 = vld [vmem:[#allocation5 + $0x38] sm:$0xff]
    %v94 = vld [vmem:[#allocation5 + $0x40] sm:$0xff]
    %v95 = vld [vmem:[#allocation5 + $0x48] sm:$0xff]
    %v96 = vld [vmem:[#allocation5 + $0x50] sm:$0xff]
    %v97 = vld [vmem:[#allocation5 + $0x58] sm:$0xff]
    %v98 = vld [vmem:[#allocation5 + $0x60] sm:$0xff]
    %v99 = vld [vmem:[#allocation5 + $0x68] sm:$0xff]
    %v100 = vld [vmem:[#allocation5 + $0x70] sm:$0xff]
    %v101 = vld [vmem:[#allocation5 + $0x78] sm:$0xff]
    %v102 = vld [vmem:[#allocation2] sm:$0xff]
    %v103 = vld [vmem:[#allocation2 + $0x8] sm:$0xff]
    %v104 = vld [vmem:[#allocation2 + $0x10] sm:$0xff]
    %v105 = vld [vmem:[#allocation2 + $0x18] sm:$0xff]
    %v106 = vld [vmem:[#allocation2 + $0x20] sm:$0xff]
    %v107 = vld [vmem:[#allocation2 + $0x28] sm:$0xff]
    %v108 = vld [vmem:[#allocation2 + $0x30] sm:$0xff]
    %v109 = vld [vmem:[#allocation2 + $0x38] sm:$0xff]
    %v110 = vld [vmem:[#allocation2 + $0x40] sm:$0xff]
    %v111 = vld [vmem:[#allocation2 + $0x48] sm:$0xff]
    %v112 = vld [vmem:[#allocation2 + $0x50] sm:$0xff]
    %v113 = vld [vmem:[#allocation2 + $0x58] sm:$0xff]
    %v114 = vld [vmem:[#allocation2 + $0x60] sm:$0xff]
    %v115 = vld [vmem:[#allocation2 + $0x68] sm:$0xff]
    %v116 = vld [vmem:[#allocation2 + $0x70] sm:$0xff]
    %v117 = vld [vmem:[#allocation2 + $0x78] sm:$0xff]
    %v118 = vmul.f32 %v86, %v102
    %v119 = vmul.f32 %v87, %v103
    %v120 = vmul.f32 %v88, %v104
    %v121 = vmul.f32 %v89, %v105
    %v122 = vmul.f32 %v90, %v106
    %v123 = vmul.f32 %v91, %v107
    %v124 = vmul.f32 %v92, %v108
    %v125 = vmul.f32 %v93, %v109
    %v126 = vmul.f32 %v94, %v110
    %v127 = vmul.f32 %v95, %v111
    %v128 = vmul.f32 %v96, %v112
    %v129 = vmul.f32 %v97, %v113
    %v130 = vmul.f32 %v98, %v114
    %v131 = vmul.f32 %v99, %v115
    %v132 = vmul.f32 %v100, %v116
    %v133 = vmul.f32 %v101, %v117
    %v134 = vld [vmem:[%s3] sm:$0x1]
    %v136 = vlaneseq
    %v137 = vshrl.u32 %v136, 7
    %v138 = vsub.s32 0, %v137
    %v139 = vrot.slane %v134, %v138
    %141 = vmatprep.subr.mxu0 0.0
    %142 = vmatpush1.msra.mxu0 %v118
    %143 = vmatprep.subr.mxu0 0.0
    %144 = vmatpush1.msra.mxu0 %v119
    %145 = vmatprep.subr.mxu0 0.0
    %146 = vmatpush1.msra.mxu0 %v120
    %147 = vmatprep.subr.mxu0 0.0
    %148 = vmatpush1.msra.mxu0 %v121
    %149 = vmatprep.subr.mxu0 0.0
    %150 = vmatpush1.msra.mxu0 %v122
    %151 = vmatprep.subr.mxu0 0.0
    %152 = vmatpush1.msra.mxu0 %v123
    %153 = vmatprep.subr.mxu0 0.0
    %154 = vmatpush1.msra.mxu0 %v124
    %155 = vmatprep.subr.mxu0 0.0
    %156 = vmatpush1.msra.mxu0 %v125
    %157 = vmatprep.subr.mxu0 0.0
    %158 = vmatpush1.msra.mxu0 %v126
    %159 = vmatprep.subr.mxu0 0.0
    %160 = vmatpush1.msra.mxu0 %v127
    %161 = vmatprep.subr.mxu0 0.0
    %162 = vmatpush1.msra.mxu0 %v128
    %163 = vmatprep.subr.mxu0 0.0
    %164 = vmatpush1.msra.mxu0 %v129
    %165 = vmatprep.subr.mxu0 0.0
    %166 = vmatpush1.msra.mxu0 %v130
    %167 = vmatprep.subr.mxu0 0.0
    %168 = vmatpush1.msra.mxu0 %v131
    %169 = vmatprep.subr.mxu0 0.0
    %170 = vmatpush1.msra.mxu0 %v132
    %171 = vmatprep.subr.mxu0 0.0
    %172 = vmatpush1.msra.mxu0 %v133
    %173 = vmatprep.subr.mxu0 0.0
    %174 = vmatpush1.msra.mxu0 0.0
    %175 = vmatprep.subr.mxu0 0.0
    %176 = vmatpush1.msra.mxu0 0.0
    %177 = vmatprep.subr.mxu0 0.0
    %178 = vmatpush1.msra.mxu0 0.0
    %179 = vmatprep.subr.mxu0 0.0
    %180 = vmatpush1.msra.mxu0 0.0
    %181 = vmatprep.subr.mxu0 0.0
    %182 = vmatpush1.msra.mxu0 0.0
    %183 = vmatprep.subr.mxu0 0.0
    %184 = vmatpush1.msra.mxu0 0.0
    %185 = vmatprep.subr.mxu0 0.0
    %186 = vmatpush1.msra.mxu0 0.0
    %187 = vmatprep.subr.mxu0 0.0
    %188 = vmatpush1.msra.mxu0 0.0
    %189 = vmatprep.subr.mxu0 0.0
    %190 = vmatpush1.msra.mxu0 0.0
    %191 = vmatprep.subr.mxu0 0.0
    %192 = vmatpush1.msra.mxu0 0.0
    %193 = vmatprep.subr.mxu0 0.0
    %194 = vmatpush1.msra.mxu0 0.0
    %195 = vmatprep.subr.mxu0 0.0
    %196 = vmatpush1.msra.mxu0 0.0
    %197 = vmatprep.subr.mxu0 0.0
    %198 = vmatpush1.msra.mxu0 0.0
    %199 = vmatprep.subr.mxu0 0.0
    %200 = vmatpush1.msra.mxu0 0.0
    %201 = vmatprep.subr.mxu0 0.0
    %202 = vmatpush1.msra.mxu0 0.0
    %203 = vmatprep.subr.mxu0 0.0
    %204 = vmatpush1.msra.mxu0 0.0
    %205 = vmatprep.mubr.f32.mxu0 0.0
    %206 = vmatmul.mubr.f32.gmra.mrb[0].mxu0 %v85
    %v207 = vpop.f32.mrb[0].mxu0
    %v208 = vadd.f32 %v139, %v207
    %v209 = vpop.f32.mrb[0].mxu0
    %210 = vdwg.mxu0
    %v211 = vmax.f32 %v208, 0.0
    %v212 = vld [vmem:[#allocation7] sm:$0xff]
    %v213 = vld [vmem:[#allocation7 + $0x8] sm:$0xff]
    %v214 = vld [vmem:[#allocation7 + $0x10] sm:$0xff]
    %v215 = vld [vmem:[#allocation7 + $0x18] sm:$0xff]
    %v216 = vld [vmem:[#allocation7 + $0x20] sm:$0xff]
    %v217 = vld [vmem:[#allocation7 + $0x28] sm:$0xff]
    %v218 = vld [vmem:[#allocation7 + $0x30] sm:$0xff]
    %v219 = vld [vmem:[#allocation7 + $0x38] sm:$0xff]
    %v220 = vld [vmem:[#allocation7 + $0x40] sm:$0xff]
    %v221 = vld [vmem:[#allocation7 + $0x48] sm:$0xff]
    %v222 = vld [vmem:[#allocation7 + $0x50] sm:$0xff]
    %v223 = vld [vmem:[#allocation7 + $0x58] sm:$0xff]
    %v224 = vld [vmem:[#allocation7 + $0x60] sm:$0xff]
    %v225 = vld [vmem:[#allocation7 + $0x68] sm:$0xff]
    %v226 = vld [vmem:[#allocation7 + $0x70] sm:$0xff]
    %v227 = vld [vmem:[#allocation7 + $0x78] sm:$0xff]
    %v228 = vld [vmem:[%s5] sm:$0x1]
    %v230 = vlaneseq
    %v231 = vshrl.u32 %v230, 7
    %v232 = vsub.s32 0, %v231
    %v233 = vrot.slane %v228, %v232
    %235 = vmatprep.subr.mxu0 0.0
    %236 = vmatpush1.msra.mxu0 %v212
    %237 = vmatprep.subr.mxu0 0.0
    %238 = vmatpush1.msra.mxu0 %v213
    %239 = vmatprep.subr.mxu0 0.0
    %240 = vmatpush1.msra.mxu0 %v214
    %241 = vmatprep.subr.mxu0 0.0
    %242 = vmatpush1.msra.mxu0 %v215
    %243 = vmatprep.subr.mxu0 0.0
    %244 = vmatpush1.msra.mxu0 %v216
    %245 = vmatprep.subr.mxu0 0.0
    %246 = vmatpush1.msra.mxu0 %v217
    %247 = vmatprep.subr.mxu0 0.0
    %248 = vmatpush1.msra.mxu0 %v218
    %249 = vmatprep.subr.mxu0 0.0
    %250 = vmatpush1.msra.mxu0 %v219
    %251 = vmatprep.subr.mxu0 0.0
    %252 = vmatpush1.msra.mxu0 %v220
    %253 = vmatprep.subr.mxu0 0.0
    %254 = vmatpush1.msra.mxu0 %v221
    %255 = vmatprep.subr.mxu0 0.0
    %256 = vmatpush1.msra.mxu0 %v222
    %257 = vmatprep.subr.mxu0 0.0
    %258 = vmatpush1.msra.mxu0 %v223
    %259 = vmatprep.subr.mxu0 0.0
    %260 = vmatpush1.msra.mxu0 %v224
    %261 = vmatprep.subr.mxu0 0.0
    %262 = vmatpush1.msra.mxu0 %v225
    %263 = vmatprep.subr.mxu0 0.0
    %264 = vmatpush1.msra.mxu0 %v226
    %265 = vmatprep.subr.mxu0 0.0
    %266 = vmatpush1.msra.mxu0 %v227
    %267 = vmatprep.subr.mxu0 0.0
    %268 = vmatpush1.msra.mxu0 0.0
    %269 = vmatprep.subr.mxu0 0.0
    %270 = vmatpush1.msra.mxu0 0.0
    %271 = vmatprep.subr.mxu0 0.0
    %272 = vmatpush1.msra.mxu0 0.0
    %273 = vmatprep.subr.mxu0 0.0
    %274 = vmatpush1.msra.mxu0 0.0
    %275 = vmatprep.subr.mxu0 0.0
    %276 = vmatpush1.msra.mxu0 0.0
    %277 = vmatprep.subr.mxu0 0.0
    %278 = vmatpush1.msra.mxu0 0.0
    %279 = vmatprep.subr.mxu0 0.0
    %280 = vmatpush1.msra.mxu0 0.0
    %281 = vmatprep.subr.mxu0 0.0
    %282 = vmatpush1.msra.mxu0 0.0
    %283 = vmatprep.subr.mxu0 0.0
    %284 = vmatpush1.msra.mxu0 0.0
    %285 = vmatprep.subr.mxu0 0.0
    %286 = vmatpush1.msra.mxu0 0.0
    %287 = vmatprep.subr.mxu0 0.0
    %288 = vmatpush1.msra.mxu0 0.0
    %289 = vmatprep.subr.mxu0 0.0
    %290 = vmatpush1.msra.mxu0 0.0
    %291 = vmatprep.subr.mxu0 0.0
    %292 = vmatpush1.msra.mxu0 0.0
    %293 = vmatprep.subr.mxu0 0.0
    %294 = vmatpush1.msra.mxu0 0.0
    %295 = vmatprep.subr.mxu0 0.0
    %296 = vmatpush1.msra.mxu0 0.0
    %297 = vmatprep.subr.mxu0 0.0
    %298 = vmatpush1.msra.mxu0 0.0
    %299 = vmatprep.mubr.f32.mxu0 0.0
    %300 = vmatmul.mubr.f32.gmra.mrb[0].mxu0 %v211
    %v301 = vpop.f32.mrb[0].mxu0
    %v302 = vadd.f32 %v233, %v301
    %v303 = vpop.f32.mrb[0].mxu0
    %304 = vdwg.mxu0
    %v305 = vmax.f32 %v302, 0.0
    %v306 = vld [vmem:[#allocation8] sm:$0xff]
    %v307 = vld [vmem:[#allocation8 + $0x8] sm:$0xff]
    %v308 = vld [vmem:[#allocation8 + $0x10] sm:$0xff]
    %v309 = vld [vmem:[#allocation8 + $0x18] sm:$0xff]
    %v310 = vld [vmem:[#allocation8 + $0x20] sm:$0xff]
    %v311 = vld [vmem:[#allocation8 + $0x28] sm:$0xff]
    %v312 = vld [vmem:[#allocation8 + $0x30] sm:$0xff]
    %v313 = vld [vmem:[#allocation8 + $0x38] sm:$0xff]
    %v314 = vld [vmem:[#allocation8 + $0x40] sm:$0xff]
    %v315 = vld [vmem:[#allocation8 + $0x48] sm:$0xff]
    %v316 = vld [vmem:[#allocation8 + $0x50] sm:$0xff]
    %v317 = vld [vmem:[#allocation8 + $0x58] sm:$0xff]
    %v318 = vld [vmem:[#allocation8 + $0x60] sm:$0xff]
    %v319 = vld [vmem:[#allocation8 + $0x68] sm:$0xff]
    %v320 = vld [vmem:[#allocation8 + $0x70] sm:$0xff]
    %v321 = vld [vmem:[#allocation8 + $0x78] sm:$0xff]
    %v322 = vld [vmem:[%s7] sm:$0x1]
    %v324 = vlaneseq
    %v325 = vshrl.u32 %v324, 7
    %v326 = vsub.s32 0, %v325
    %v327 = vrot.slane %v322, %v326
    %329 = vmatprep.subr.mxu0 0.0
    %330 = vmatpush1.msra.mxu0 %v306
    %331 = vmatprep.subr.mxu0 0.0
    %332 = vmatpush1.msra.mxu0 %v307
    %333 = vmatprep.subr.mxu0 0.0
    %334 = vmatpush1.msra.mxu0 %v308
    %335 = vmatprep.subr.mxu0 0.0
    %336 = vmatpush1.msra.mxu0 %v309
    %337 = vmatprep.subr.mxu0 0.0
    %338 = vmatpush1.msra.mxu0 %v310
    %339 = vmatprep.subr.mxu0 0.0
    %340 = vmatpush1.msra.mxu0 %v311
    %341 = vmatprep.subr.mxu0 0.0
    %342 = vmatpush1.msra.mxu0 %v312
    %343 = vmatprep.subr.mxu0 0.0
    %344 = vmatpush1.msra.mxu0 %v313
    %345 = vmatprep.subr.mxu0 0.0
    %346 = vmatpush1.msra.mxu0 %v314
    %347 = vmatprep.subr.mxu0 0.0
    %348 = vmatpush1.msra.mxu0 %v315
    %349 = vmatprep.subr.mxu0 0.0
    %350 = vmatpush1.msra.mxu0 %v316
    %351 = vmatprep.subr.mxu0 0.0
    %352 = vmatpush1.msra.mxu0 %v317
    %353 = vmatprep.subr.mxu0 0.0
    %354 = vmatpush1.msra.mxu0 %v318
    %355 = vmatprep.subr.mxu0 0.0
    %356 = vmatpush1.msra.mxu0 %v319
    %357 = vmatprep.subr.mxu0 0.0
    %358 = vmatpush1.msra.mxu0 %v320
    %359 = vmatprep.subr.mxu0 0.0
    %360 = vmatpush1.msra.mxu0 %v321
    %361 = vmatprep.subr.mxu0 0.0
    %362 = vmatpush1.msra.mxu0 0.0
    %363 = vmatprep.subr.mxu0 0.0
    %364 = vmatpush1.msra.mxu0 0.0
    %365 = vmatprep.subr.mxu0 0.0
    %366 = vmatpush1.msra.mxu0 0.0
    %367 = vmatprep.subr.mxu0 0.0
    %368 = vmatpush1.msra.mxu0 0.0
    %369 = vmatprep.subr.mxu0 0.0
    %370 = vmatpush1.msra.mxu0 0.0
    %371 = vmatprep.subr.mxu0 0.0
    %372 = vmatpush1.msra.mxu0 0.0
    %373 = vmatprep.subr.mxu0 0.0
    %374 = vmatpush1.msra.mxu0 0.0
    %375 = vmatprep.subr.mxu0 0.0
    %376 = vmatpush1.msra.mxu0 0.0
    %377 = vmatprep.subr.mxu0 0.0
    %378 = vmatpush1.msra.mxu0 0.0
    %379 = vmatprep.subr.mxu0 0.0
    %380 = vmatpush1.msra.mxu0 0.0
    %381 = vmatprep.subr.mxu0 0.0
    %382 = vmatpush1.msra.mxu0 0.0
    %383 = vmatprep.subr.mxu0 0.0
    %384 = vmatpush1.msra.mxu0 0.0
    %385 = vmatprep.subr.mxu0 0.0
    %386 = vmatpush1.msra.mxu0 0.0
    %387 = vmatprep.subr.mxu0 0.0
    %388 = vmatpush1.msra.mxu0 0.0
    %389 = vmatprep.subr.mxu0 0.0
    %390 = vmatpush1.msra.mxu0 0.0
    %391 = vmatprep.subr.mxu0 0.0
    %392 = vmatpush1.msra.mxu0 0.0
    %393 = vmatprep.mubr.f32.mxu0 0.0
    %394 = vmatmul.mubr.f32.gmra.mrb[0].mxu0 %v305
    %v395 = vpop.f32.mrb[0].mxu0
    %v396 = vadd.f32 %v327, %v395
    %v397 = vpop.f32.mrb[0].mxu0
    %398 = vdwg.mxu0
    %vm399 = vcmask 25600
    %v400 = vsel %vm399, %v396, -inf
    %401 = vmax.xlane.f32.xlu0 %v400
    %v402 = vpop.xlane.xlu0 %401
    %v403 = vsub.f32 %v396, %v402
    %v404 = vmul.f32 %v403, 1.442695
    %v405 = vpow.pop %v404
    %v406 = vsel %vm399, %v405, 0.0
    %407 = vadd.xlane.f32.xlu0 %v406
    %v408 = vpop.xlane.xlu0 %407
    %v409 = vlog2.pop %v408
    %v410 = vmul.f32 %v409, 0.6931472
    %v411 = vsub.f32 %v403, %v410
    %412 = vst.msk [vmem:[#allocation10] sm:$0x3] %vm399, %v411
    // Predicated region
    $region50: #{fcn_forward.1} parent=1 // pred_check
      _
    $region51: #{fcn_forward.1} parent=1 // pred_check_branch
      %414 = sbr.rel (0) target = $region53
    $region52: #{fcn_forward.1} parent=1 // pred_region
      %s416 = ssub.s32 32, 32
      %417 = vsyncadd [#allocation4], %s416
      %s419 = sshll.u32 [#allocation10], 4
      %s420 = int_to_ptr.vmem [resolvable:$true] %s419
      %422 = dma.vmem_to_hbm [thread:$0]  %s420, 32, %s8, [#allocation4]
    $region53: #{fcn_forward.1} parent=1 // pred_fallthru
      _
    // Predicated region
    $region54: #{fcn_forward.1} parent=1 // pred_check
      _
    $region55: #{fcn_forward.1} parent=1 // pred_check_branch
      %424 = sbr.rel (0) target = $region57
    $region56: #{fcn_forward.1} parent=1 // pred_region
      %425 = dma.done [#allocation4], 32
    $region57: #{fcn_forward.1} parent=1 // pred_fallthru
      _
    %426 = vsyncpa [#allocation3], 1
    %427 = vsyncpa [#allocation6], 1
    %428 = vsyncpa [#allocation9], 1
    %429 = vsyncpa [#allocation4], 1

</llo_original>
